<compile_context>
chip_gen: v7x
topology: tpu7x:2x2x1
jax: 0.10.0
libtpu: 0.0.40
codegen_flags: <defaults>
</compile_context>

<pallas_src>
import functools

import jax
import jax.numpy as jnp
from jax import lax
from jax.experimental import pallas as pl
from jax.experimental.pallas import tpu as pltpu

EPS = 1e-08
LANES = 128   # hidden-width padding granularity; use 256 on v6e/v7x if H >= 128


# ----------------------------------------------------------------------------
# Kernel: one batch tile of the 3-layer T network on the stacked input.
# ----------------------------------------------------------------------------
def mine_t_kernel(z_ref, w1_ref, b1_ref, w2_ref, b2_ref, w3t_ref, b3_ref,
                  t_ref):
    # z_ref   (tb, DX+DY) bf16   stacked [x||y ; x||y_shuffled] rows
    # w1_ref  (DX+DY, H)  bf16
    # b1/b2   (1, H)      f32
    # w2_ref  (H, H)      bf16
    # w3t_ref (1, H)      bf16
    # b3_ref  (1, 1)      f32
    # t_ref   (1, tb)     f32    lane-dense output (batch on the 128-lane axis)
    z = z_ref[...]

    h1 = jnp.dot(z, w1_ref[...], preferred_element_type=jnp.float32)
    h1 = jnp.maximum(h1 + b1_ref[...], 0.0).astype(jnp.bfloat16)

    h2 = jnp.dot(h1, w2_ref[...], preferred_element_type=jnp.float32)
    h2 = jnp.maximum(h2 + b2_ref[...], 0.0).astype(jnp.bfloat16)

    # Output head, lane-dense: contract the hidden dim of (1, H) with (tb, H)
    # so t comes out as (1, tb) — no transpose, no masked (tb, 1) store.
    dn = (((1,), (1,)), ((), ()))
    t = lax.dot_general(w3t_ref[...], h2, dn, preferred_element_type=jnp.float32)
    t_ref[...] = t + b3_ref[...]


# ----------------------------------------------------------------------------
# Batch-tiled pallas_call wrapper around the T network.
# ----------------------------------------------------------------------------
def _pick_row_tile(n_rows, tb_max=512):
    if n_rows <= tb_max:
        return n_rows
    for tb in (tb_max, 256, 128):
        if n_rows % tb == 0:
            return tb
    raise ValueError("at training scale, 2*B must be a multiple of 128")


def t_network_pallas(z, params):
    """T network over the stacked (N, DX+DY) input; returns (1, N) float32."""
    n, d = z.shape
    h = params["w2"].shape[0]
    tb = _pick_row_tile(n)
    assert n % tb == 0
    grid = (n // tb,)

    # bf16 MXU inputs; f32 accumulation / biases / outputs.
    zb = z.astype(jnp.bfloat16)
    w1 = params["w1"].astype(jnp.bfloat16)
    w2 = params["w2"].astype(jnp.bfloat16)
    w3t = params["w3t"].astype(jnp.bfloat16)

    const = lambda i: (0, 0)   # weights stay VMEM-resident across grid steps
    return pl.pallas_call(
        mine_t_kernel,
        out_shape=jax.ShapeDtypeStruct((1, n), jnp.float32),
        grid=grid,
        in_specs=[
            pl.BlockSpec((tb, d), lambda i: (i, 0)),   # stacked input tiles
            pl.BlockSpec((d, h), const),               # W1
            pl.BlockSpec((1, h), const),               # b1
            pl.BlockSpec((h, h), const),               # W2
            pl.BlockSpec((1, h), const),               # b2
            pl.BlockSpec((1, h), const),               # w3^T
            pl.BlockSpec((1, 1), const),               # b3
        ],
        out_specs=pl.BlockSpec((1, tb), lambda i: (0, i)),
        compiler_params=pltpu.CompilerParams(
            dimension_semantics=("parallel",),          # shards over v7x's 2 TCs
            vmem_limit_bytes=32 * 1024 * 1024,
        ),
    )(zb, w1, params["b1"], w2, params["b2"], w3t, params["b3"])


# ----------------------------------------------------------------------------
# Mine.forward — glue around the fused kernel.  `running_mean` is the
# explicitly-threaded equivalent of the PyTorch registered buffer.
# ----------------------------------------------------------------------------
@functools.partial(jax.jit, static_argnames=("alpha",))
def mine_forward(x, y, params, running_mean, perm_key, alpha=0.01):
    B = x.shape[0]

    # y_shuffled = y[randperm(B)] — linear-cost gather in the wrapper.
    perm = jax.random.permutation(perm_key, B)
    y_shuf = y[perm]

    # Stack paired and shuffled rows so every layer is a single matmul.
    z = jnp.concatenate(
        [jnp.concatenate([x, y], axis=1),
         jnp.concatenate([x, y_shuf], axis=1)], axis=0)          # (2B, DX+DY)

    t_all = t_network_pallas(z, params)                          # (1, 2B) f32
    t_row = t_all[0, :B]
    ts_row = t_all[0, B:]

    t = t_row.reshape(B, 1)
    t_shuffled = ts_row.reshape(B, 1)

    first_term = jnp.mean(t_row)

    # Numerically stable mean(exp(t_shuffled)) = exp(logsumexp(ts) - log B).
    m = jnp.max(ts_row)
    exp_mean = jnp.exp(m + jnp.log(jnp.sum(jnp.exp(ts_row - m)))
                       - jnp.log(jnp.float32(B)))

    # running_mean = alpha * exp_mean.detach() + (1 - alpha) * running_mean
    new_running_mean = (alpha * lax.stop_gradient(exp_mean)
                        + (1.0 - alpha) * running_mean)
    second_term = jnp.log(new_running_mean + EPS)

    mi_estimate = first_term   # matches the PyTorch reference exactly
    outputs = (mi_estimate,
               lax.stop_gradient(t),
               lax.stop_gradient(t_shuffled),
               lax.stop_gradient(first_term),
               lax.stop_gradient(second_term))
    return outputs, new_running_mean


# ----------------------------------------------------------------------------
# Deterministic T-network parameters + zero-padding of the hidden width to a
# multiple of 128 lanes (numerically exact: ReLU(0)=0, zero columns add 0).
# ----------------------------------------------------------------------------
def init_t_params(key, dx, dy, hidden):
    ks = jax.random.split(key, 3)
    scale = 0.1
    return {
        "w1": scale * jax.random.normal(ks[0], (dx + dy, hidden), jnp.float32),
        "b1": jnp.zeros((1, hidden), jnp.float32),
        "w2": scale * jax.random.normal(ks[1], (hidden, hidden), jnp.float32),
        "b2": jnp.zeros((1, hidden), jnp.float32),
        "w3t": scale * jax.random.normal(ks[2], (1, hidden), jnp.float32),
        "b3": jnp.zeros((1, 1), jnp.float32),
    }


def pad_params_to_lanes(params, lanes=LANES):
    h = params["w2"].shape[0]
    hp = ((h + lanes - 1) // lanes) * lanes
    if hp == h:
        return params
    pc = hp - h
    return {
        "w1": jnp.pad(params["w1"], ((0, 0), (0, pc))),
        "b1": jnp.pad(params["b1"], ((0, 0), (0, pc))),
        "w2": jnp.pad(params["w2"], ((0, pc), (0, pc))),
        "b2": jnp.pad(params["b2"], ((0, 0), (0, pc))),
        "w3t": jnp.pad(params["w3t"], ((0, 0), (0, pc))),
        "b3": params["b3"],
    }


# ----------------------------------------------------------------------------
# Pure-JAX reference mirroring the kernel's bf16-in / f32-accumulate math.
# ----------------------------------------------------------------------------
def t_reference(z, params):
    zb = z.astype(jnp.bfloat16)
    w1 = params["w1"].astype(jnp.bfloat16)
    w2 = params["w2"].astype(jnp.bfloat16)
    w3t = params["w3t"].astype(jnp.bfloat16)
    h1 = jnp.maximum(jnp.dot(zb, w1, preferred_element_type=jnp.float32)
                     + params["b1"], 0.0).astype(jnp.bfloat16)
    h2 = jnp.maximum(jnp.dot(h1, w2, preferred_element_type=jnp.float32)
                     + params["b2"], 0.0).astype(jnp.bfloat16)
    return jnp.dot(h2, w3t.T, preferred_element_type=jnp.float32) + params["b3"]


if __name__ == "__main__":
    B, DX, DY, HIDDEN = 8, 16, 16, 32
    ALPHA = 0.01

    key = jax.random.PRNGKey(0)
    kx, ky, kparams, kperm = jax.random.split(key, 4)

    x = jax.random.normal(kx, (B, DX), jnp.float32)
    y = jax.random.normal(ky, (B, DY), jnp.float32)
    params = pad_params_to_lanes(init_t_params(kparams, DX, DY, HIDDEN))
    running_mean = jnp.float32(0.0)   # register_buffer('running_mean', 0.0)

    outputs, running_mean = mine_forward(x, y, params, running_mean, kperm,
                                         alpha=ALPHA)
    outputs = jax.block_until_ready(outputs)
    running_mean = jax.block_until_ready(running_mean)

    mi_estimate, t, t_shuffled, first_term, second_term = outputs
    assert t.shape == (B, 1) and t_shuffled.shape == (B, 1)
    assert mi_estimate.shape == () and first_term.shape == ()
    assert second_term.shape == ()

    # Verify against a pure-JAX reference with the same permutation and the
    # same bf16 matmul inputs / f32 accumulation.
    perm = jax.random.permutation(kperm, B)
    z_pair = jnp.concatenate([x, y], axis=1)
    z_shuf = jnp.concatenate([x, y[perm]], axis=1)
    t_ref = t_reference(z_pair, params)
    ts_ref = t_reference(z_shuf, params)
    exp_mean_ref = jnp.mean(jnp.exp(ts_ref))
    rm_ref = ALPHA * exp_mean_ref + (1.0 - ALPHA) * 0.0

    assert jnp.allclose(t, t_ref, rtol=1e-3, atol=1e-3)
    assert jnp.allclose(t_shuffled, ts_ref, rtol=1e-3, atol=1e-3)
    assert jnp.allclose(first_term, jnp.mean(t_ref), rtol=1e-3, atol=1e-3)
    assert jnp.allclose(mi_estimate, jnp.mean(t_ref), rtol=1e-3, atol=1e-3)
    assert jnp.allclose(running_mean, rm_ref, rtol=1e-3, atol=1e-3)
    assert jnp.allclose(second_term, jnp.log(rm_ref + EPS), rtol=1e-3, atol=1e-3)

    print("KERNEL_OK")
</pallas_src>

<mosaic_0001>
module attributes {stable_mosaic.version = 11 : i64} {
  func.func @mine_t_kernel(%arg0: i32, %arg1: memref<16x32xbf16, #tpu.memory_space<vmem>>, %arg2: memref<32x128xbf16, #tpu.memory_space<vmem>>, %arg3: memref<1x128xf32, #tpu.memory_space<vmem>>, %arg4: memref<128x128xbf16, #tpu.memory_space<vmem>>, %arg5: memref<1x128xf32, #tpu.memory_space<vmem>>, %arg6: memref<1x128xbf16, #tpu.memory_space<vmem>>, %arg7: memref<1x1xf32, #tpu.memory_space<vmem>>, %arg8: memref<1x16xf32, #tpu.memory_space<vmem>>) attributes {dimension_semantics = [#tpu.dimension_semantics<parallel>], iteration_bounds = array<i64: 1>, scalar_prefetch = 0 : i64, scratch_operands = 0 : i64, tpu.core_type = #tpu.core_type<tc>, window_params = [{transform_indices = @transform_0, window_bounds = array<i64: 16, 32>}, {pipeline_mode = #tpu.pipeline_mode<synchronous>, transform_indices = @transform_1, window_bounds = array<i64: 32, 128>}, {pipeline_mode = #tpu.pipeline_mode<synchronous>, transform_indices = @transform_2, window_bounds = array<i64: 1, 128>}, {pipeline_mode = #tpu.pipeline_mode<synchronous>, transform_indices = @transform_3, window_bounds = array<i64: 128, 128>}, {pipeline_mode = #tpu.pipeline_mode<synchronous>, transform_indices = @transform_4, window_bounds = array<i64: 1, 128>}, {pipeline_mode = #tpu.pipeline_mode<synchronous>, transform_indices = @transform_5, window_bounds = array<i64: 1, 128>}, {pipeline_mode = #tpu.pipeline_mode<synchronous>, transform_indices = @transform_6, window_bounds = array<i64: 1, 1>}, {transform_indices = @transform_7, window_bounds = array<i64: 1, 16>}]} {
    %c0 = arith.constant 0 : index
    %c0_0 = arith.constant 0 : index
    %0 = vector.load %arg1[%c0, %c0_0] : memref<16x32xbf16, #tpu.memory_space<vmem>>, vector<16x32xbf16>
    %c0_1 = arith.constant 0 : index
    %c0_2 = arith.constant 0 : index
    %1 = vector.load %arg2[%c0_1, %c0_2] : memref<32x128xbf16, #tpu.memory_space<vmem>>, vector<32x128xbf16>
    %cst = arith.constant dense<0.000000e+00> : vector<16x128xf32>
    %2 = tpu.matmul %0, %1, %cst {dimension_numbers = #tpu.dot_dimension_numbers<[1], [0], [0], [1], [0, 0, 1, 1], [], []>} : vector<16x32xbf16>, vector<32x128xbf16>, vector<16x128xf32> -> vector<16x128xf32>
    %c0_3 = arith.constant 0 : index
    %c0_4 = arith.constant 0 : index
    %3 = vector.load %arg3[%c0_3, %c0_4] : memref<1x128xf32, #tpu.memory_space<vmem>>, vector<1x128xf32>
    %4 = vector.broadcast %3 : vector<1x128xf32> to vector<16x128xf32>
    %5 = arith.addf %2, %4 : vector<16x128xf32>
    %cst_5 = arith.constant 0.000000e+00 : f32
    %6 = vector.broadcast %cst_5 : f32 to vector<16x128xf32>
    %7 = arith.maximumf %5, %6 : vector<16x128xf32>
    %8 = arith.truncf %7 : vector<16x128xf32> to vector<16x128xbf16>
    %c0_6 = arith.constant 0 : index
    %c0_7 = arith.constant 0 : index
    %9 = vector.load %arg4[%c0_6, %c0_7] : memref<128x128xbf16, #tpu.memory_space<vmem>>, vector<128x128xbf16>
    %cst_8 = arith.constant dense<0.000000e+00> : vector<16x128xf32>
    %10 = tpu.matmul %8, %9, %cst_8 {dimension_numbers = #tpu.dot_dimension_numbers<[1], [0], [0], [1], [0, 0, 1, 1], [], []>} : vector<16x128xbf16>, vector<128x128xbf16>, vector<16x128xf32> -> vector<16x128xf32>
    %c0_9 = arith.constant 0 : index
    %c0_10 = arith.constant 0 : index
    %11 = vector.load %arg5[%c0_9, %c0_10] : memref<1x128xf32, #tpu.memory_space<vmem>>, vector<1x128xf32>
    %12 = vector.broadcast %11 : vector<1x128xf32> to vector<16x128xf32>
    %13 = arith.addf %10, %12 : vector<16x128xf32>
    %cst_11 = arith.constant 0.000000e+00 : f32
    %14 = vector.broadcast %cst_11 : f32 to vector<16x128xf32>
    %15 = arith.maximumf %13, %14 : vector<16x128xf32>
    %16 = arith.truncf %15 : vector<16x128xf32> to vector<16x128xbf16>
    %c0_12 = arith.constant 0 : index
    %c0_13 = arith.constant 0 : index
    %17 = vector.load %arg6[%c0_12, %c0_13] : memref<1x128xbf16, #tpu.memory_space<vmem>>, vector<1x128xbf16>
    %cst_14 = arith.constant dense<0.000000e+00> : vector<1x16xf32>
    %18 = tpu.matmul %17, %16, %cst_14 {dimension_numbers = #tpu.dot_dimension_numbers<[1], [1], [0], [0], [0, 0, 1, 0], [], []>} : vector<1x128xbf16>, vector<16x128xbf16>, vector<1x16xf32> -> vector<1x16xf32>
    %c0_15 = arith.constant 0 : index
    %c0_16 = arith.constant 0 : index
    %19 = vector.load %arg7[%c0_15, %c0_16] : memref<1x1xf32, #tpu.memory_space<vmem>>, vector<1x1xf32>
    %20 = vector.broadcast %19 : vector<1x1xf32> to vector<1x16xf32>
    %21 = arith.addf %18, %20 : vector<1x16xf32>
    %c0_17 = arith.constant 0 : index
    %c0_18 = arith.constant 0 : index
    %22 = vector.load %arg8[%c0_17, %c0_18] : memref<1x16xf32, #tpu.memory_space<vmem>>, vector<1x16xf32>
    tpu.vector_store %arg8[%c0_17, %c0_18], %21 {strides = array<i32>} : memref<1x16xf32, #tpu.memory_space<vmem>>, vector<1x16xf32>,
    return
  }
  func.func @transform_0(%arg0: i32) -> (i32, i32) {
    %c0_i32 = arith.constant 0 : i32
    %c0_i32_0 = arith.constant 0 : i32
    return %arg0, %c0_i32 : i32, i32
  }
  func.func @transform_1(%arg0: i32) -> (i32, i32) {
    %c0_i32 = arith.constant 0 : i32
    %c0_i32_0 = arith.constant 0 : i32
    %c0_i32_1 = arith.constant 0 : i32
    return %c0_i32, %c0_i32_0 : i32, i32
  }
  func.func @transform_2(%arg0: i32) -> (i32, i32) {
    %c0_i32 = arith.constant 0 : i32
    %c0_i32_0 = arith.constant 0 : i32
    %c0_i32_1 = arith.constant 0 : i32
    return %c0_i32, %c0_i32_0 : i32, i32
  }
  func.func @transform_3(%arg0: i32) -> (i32, i32) {
    %c0_i32 = arith.constant 0 : i32
    %c0_i32_0 = arith.constant 0 : i32
    %c0_i32_1 = arith.constant 0 : i32
    return %c0_i32, %c0_i32_0 : i32, i32
  }
  func.func @transform_4(%arg0: i32) -> (i32, i32) {
    %c0_i32 = arith.constant 0 : i32
    %c0_i32_0 = arith.constant 0 : i32
    %c0_i32_1 = arith.constant 0 : i32
    return %c0_i32, %c0_i32_0 : i32, i32
  }
  func.func @transform_5(%arg0: i32) -> (i32, i32) {
    %c0_i32 = arith.constant 0 : i32
    %c0_i32_0 = arith.constant 0 : i32
    %c0_i32_1 = arith.constant 0 : i32
    return %c0_i32, %c0_i32_0 : i32, i32
  }
  func.func @transform_6(%arg0: i32) -> (i32, i32) {
    %c0_i32 = arith.constant 0 : i32
    %c0_i32_0 = arith.constant 0 : i32
    %c0_i32_1 = arith.constant 0 : i32
    return %c0_i32, %c0_i32_0 : i32, i32
  }
  func.func @transform_7(%arg0: i32) -> (i32, i32) {
    %c0_i32 = arith.constant 0 : i32
    %c0_i32_0 = arith.constant 0 : i32
    return %c0_i32, %arg0 : i32, i32
  }
}

</mosaic_0001>

<llo_original>
// kernel: mine_forward.1
$region0: #{mine_forward.1}
  #allocation0 [shape = 'u32[]', space=smem, size = 0x4, offset = 0x4, fixed_abs, tag = 'smem constant byte address 0x4 - core index']
  #allocation1 [shape = 'u32[144,128]{1,0:T(1,128)}', space=vmem, size = 0x12000, scoped, tag = 'internal scratch']
  #allocation2 [shape = 'f32[1,1]{1,0:T(1,128)S(1)}', space=vmem, size = 0x200, scoped, tag = 'scoped memory for mine_forward.1']
  %s0 = inlined_call_operand.vmem [shape: bf16[16,32], index: 0, kind: input, shape index: {}]
  %s1 = inlined_call_operand.vmem [shape: bf16[32,128], index: 1, kind: input, shape index: {}]
  %s2 = inlined_call_operand.vmem [shape: f32[1,128], index: 2, kind: input, shape index: {}]
  %s3 = inlined_call_operand.vmem [shape: bf16[128,128], index: 3, kind: input, shape index: {}]
  %s4 = inlined_call_operand.vmem [shape: f32[1,128], index: 4, kind: input, shape index: {}]
  %s5 = inlined_call_operand.vmem [shape: bf16[1,128], index: 5, kind: input, shape index: {}]
  %s6 = inlined_call_operand.<no memory space> [shape: f32[1,1], index: 6, kind: input, shape index: {}]
  %s7 = inlined_call_operand.vmem [shape: f32[1,16], index: 7, kind: output, shape index: {}]
  %s8 = sld [smem:[#allocation0]]
  $region38: #{mine_forward.1} parent=0
    _
  %s10 = ssub.s32 1, %s8
  %s11 = scalar_select 0, %s10, %s8
  %v12 = vstv %s6
  %13 = vst [vmem:[#allocation2] sm:$0x1] %v12
  // Predicated region
  $region2: #{mine_forward.1} parent=0 // pred_check
    _
  $region3: #{mine_forward.1} parent=0 // pred_check_branch
    %15 = sbr.rel (0) target = $region5
  $region4: #{mine_forward.1} parent=0 // pred_region
    _
  $region5: #{mine_forward.1} parent=0 // pred_fallthru
    _
  // Predicated region
  $region6: #{mine_forward.1} parent=0 // pred_check
    _
  $region7: #{mine_forward.1} parent=0 // pred_check_branch
    %17 = sbr.rel (0) target = $region9
  $region8: #{mine_forward.1} parent=0 // pred_region
    _
  $region9: #{mine_forward.1} parent=0 // pred_fallthru
    _
  // Predicated region
  $region10: #{mine_forward.1} parent=0 // pred_check
    _
  $region11: #{mine_forward.1} parent=0 // pred_check_branch
    %19 = sbr.rel (0) target = $region13
  $region12: #{mine_forward.1} parent=0 // pred_region
    _
  $region13: #{mine_forward.1} parent=0 // pred_fallthru
    _
  // Predicated region
  $region14: #{mine_forward.1} parent=0 // pred_check
    _
  $region15: #{mine_forward.1} parent=0 // pred_check_branch
    %21 = sbr.rel (0) target = $region17
  $region16: #{mine_forward.1} parent=0 // pred_region
    _
  $region17: #{mine_forward.1} parent=0 // pred_fallthru
    _
  // Predicated region
  $region18: #{mine_forward.1} parent=0 // pred_check
    _
  $region19: #{mine_forward.1} parent=0 // pred_check_branch
    %23 = sbr.rel (0) target = $region21
  $region20: #{mine_forward.1} parent=0 // pred_region
    _
  $region21: #{mine_forward.1} parent=0 // pred_fallthru
    _
  // Predicated region
  $region22: #{mine_forward.1} parent=0 // pred_check
    _
  $region23: #{mine_forward.1} parent=0 // pred_check_branch
    %25 = sbr.rel (0) target = $region25
  $region24: #{mine_forward.1} parent=0 // pred_region
    _
  $region25: #{mine_forward.1} parent=0 // pred_fallthru
    _
  // Predicated region
  $region26: #{mine_forward.1} parent=0 // pred_check
    _
  $region27: #{mine_forward.1} parent=0 // pred_check_branch
    %27 = sbr.rel (0) target = $region29
  $region28: #{mine_forward.1} parent=0 // pred_region
    _
  $region29: #{mine_forward.1} parent=0 // pred_fallthru
    _
  %v29 = vld [vmem:[%s0] sm:$0xf]
  %v30 = vld [vmem:[%s0 + $0x4] sm:$0xf]
  %v31 = vld [vmem:[%s1] sm:$0xf]
  %v32 = vld [vmem:[%s1 + $0x4] sm:$0xf]
  %v33 = vld [vmem:[%s1 + $0x8] sm:$0xf]
  %v34 = vld [vmem:[%s1 + $0xc] sm:$0xf]
  %v35 = vld [vmem:[%s2] sm:$0x1]
  %v37 = vlaneseq
  %v38 = vshrl.u32 %v37, 7
  %v39 = vsub.s32 0, %v38
  %v40 = vrot.slane %v35, %v39
  %v44 = vunpack.c.l.b16 %v29
  %v45 = vunpack.c.l.b16 %v30
  %v46 = vpack.c.b16 %v45, %v44
  %v51 = vunpack.c.l.b16 %v31
  %v52 = vunpack.c.l.b16 %v32
  %v53 = vunpack.c.l.b16 %v33
  %v54 = vunpack.c.l.b16 %v34
  %v55 = vpack.c.b16 %v52, %v51
  %v56 = vpack.c.b16 %v54, %v53
  %vm59 = vcmask 261120
  %v61 = vsel %vm59, %v46, 0
  %63 = vmatprep.subr.bf16.mxu0 0
  %64 = vmatpush1.bf16.msra.mxu0 %v55
  %65 = vmatprep.subr.bf16.mxu0 0
  %66 = vmatpush1.bf16.msra.mxu0 %v56
  %67 = vmatprep.subr.bf16.mxu0 0
  %68 = vmatpush1.bf16.msra.mxu0 0
  %69 = vmatprep.subr.bf16.mxu0 0
  %70 = vmatpush1.bf16.msra.mxu0 0
  %71 = vmatprep.subr.bf16.mxu0 0
  %72 = vmatpush1.bf16.msra.mxu0 0
  %73 = vmatprep.subr.bf16.mxu0 0
  %74 = vmatpush1.bf16.msra.mxu0 0
  %75 = vmatprep.subr.bf16.mxu0 0
  %76 = vmatpush1.bf16.msra.mxu0 0
  %77 = vmatprep.subr.bf16.mxu0 0
  %78 = vmatpush1.bf16.msra.mxu0 0
  %79 = vmatprep.subr.bf16.mxu0 0
  %80 = vmatpush1.bf16.msra.mxu0 0
  %81 = vmatprep.subr.bf16.mxu0 0
  %82 = vmatpush1.bf16.msra.mxu0 0
  %83 = vmatprep.subr.bf16.mxu0 0
  %84 = vmatpush1.bf16.msra.mxu0 0
  %85 = vmatprep.subr.bf16.mxu0 0
  %86 = vmatpush1.bf16.msra.mxu0 0
  %87 = vmatprep.subr.bf16.mxu0 0
  %88 = vmatpush1.bf16.msra.mxu0 0
  %89 = vmatprep.subr.bf16.mxu0 0
  %90 = vmatpush1.bf16.msra.mxu0 0
  %91 = vmatprep.subr.bf16.mxu0 0
  %92 = vmatpush1.bf16.msra.mxu0 0
  %93 = vmatprep.subr.bf16.mxu0 0
  %94 = vmatpush1.bf16.msra.mxu0 0
  %95 = vmatprep.mubr.bf16.mxu0 0
  %96 = vmatmul.mubr.bf16.gmra.mrb[0].mxu0 %v61
  %v97 = vpop.f32.mrb[0].mxu0
  %v98 = vadd.f32 %v40, %v97
  %v99 = vpop.f32.mrb[0].mxu0
  %v100 = vpop.f32.mrb[0].mxu0
  %v101 = vadd.f32 %v40, %v100
  %v102 = vpop.f32.mrb[0].mxu0
  %103 = vdwg.mxu0
  %v104 = vmax.f32 %v98, 0.0
  %v105 = vmax.f32 %v101, 0.0
  %v106 = vpack.c.bf16 %v105, %v104
  %v107 = vld [vmem:[%s3] sm:$0xf]
  %v108 = vld [vmem:[%s3 + $0x4] sm:$0xf]
  %v109 = vld [vmem:[%s3 + $0x8] sm:$0xf]
  %v110 = vld [vmem:[%s3 + $0xc] sm:$0xf]
  %v111 = vld [vmem:[%s3 + $0x10] sm:$0xf]
  %v112 = vld [vmem:[%s3 + $0x14] sm:$0xf]
  %v113 = vld [vmem:[%s3 + $0x18] sm:$0xf]
  %v114 = vld [vmem:[%s3 + $0x1c] sm:$0xf]
  %v115 = vld [vmem:[%s3 + $0x20] sm:$0xf]
  %v116 = vld [vmem:[%s3 + $0x24] sm:$0xf]
  %v117 = vld [vmem:[%s3 + $0x28] sm:$0xf]
  %v118 = vld [vmem:[%s3 + $0x2c] sm:$0xf]
  %v119 = vld [vmem:[%s3 + $0x30] sm:$0xf]
  %v120 = vld [vmem:[%s3 + $0x34] sm:$0xf]
  %v121 = vld [vmem:[%s3 + $0x38] sm:$0xf]
  %v122 = vld [vmem:[%s3 + $0x3c] sm:$0xf]
  %v123 = vld [vmem:[%s4] sm:$0x1]
  %v125 = vlaneseq
  %v126 = vshrl.u32 %v125, 7
  %v127 = vsub.s32 0, %v126
  %v128 = vrot.slane %v123, %v127
  %v146 = vunpack.c.l.b16 %v107
  %v147 = vunpack.c.l.b16 %v108
  %v148 = vunpack.c.l.b16 %v109
  %v149 = vunpack.c.l.b16 %v110
  %v150 = vunpack.c.l.b16 %v111
  %v151 = vunpack.c.l.b16 %v112
  %v152 = vunpack.c.l.b16 %v113
  %v153 = vunpack.c.l.b16 %v114
  %v154 = vunpack.c.l.b16 %v115
  %v155 = vunpack.c.l.b16 %v116
  %v156 = vunpack.c.l.b16 %v117
  %v157 = vunpack.c.l.b16 %v118
  %v158 = vunpack.c.l.b16 %v119
  %v159 = vunpack.c.l.b16 %v120
  %v160 = vunpack.c.l.b16 %v121
  %v161 = vunpack.c.l.b16 %v122
  %v162 = vpack.c.b16 %v147, %v146
  %v163 = vpack.c.b16 %v149, %v148
  %v164 = vpack.c.b16 %v151, %v150
  %v165 = vpack.c.b16 %v153, %v152
  %v166 = vpack.c.b16 %v155, %v154
  %v167 = vpack.c.b16 %v157, %v156
  %v168 = vpack.c.b16 %v159, %v158
  %v169 = vpack.c.b16 %v161, %v160
  %178 = vmatprep.subr.bf16.mxu0 0
  %179 = vmatpush1.bf16.msra.mxu0 %v162
  %180 = vmatprep.subr.bf16.mxu0 0
  %181 = vmatpush1.bf16.msra.mxu0 %v163
  %182 = vmatprep.subr.bf16.mxu0 0
  %183 = vmatpush1.bf16.msra.mxu0 %v164
  %184 = vmatprep.subr.bf16.mxu0 0
  %185 = vmatpush1.bf16.msra.mxu0 %v165
  %186 = vmatprep.subr.bf16.mxu0 0
  %187 = vmatpush1.bf16.msra.mxu0 %v166
  %188 = vmatprep.subr.bf16.mxu0 0
  %189 = vmatpush1.bf16.msra.mxu0 %v167
  %190 = vmatprep.subr.bf16.mxu0 0
  %191 = vmatpush1.bf16.msra.mxu0 %v168
  %192 = vmatprep.subr.bf16.mxu0 0
  %193 = vmatpush1.bf16.msra.mxu0 %v169
  %194 = vmatprep.subr.bf16.mxu0 0
  %195 = vmatpush1.bf16.msra.mxu0 0
  %196 = vmatprep.subr.bf16.mxu0 0
  %197 = vmatpush1.bf16.msra.mxu0 0
  %198 = vmatprep.subr.bf16.mxu0 0
  %199 = vmatpush1.bf16.msra.mxu0 0
  %200 = vmatprep.subr.bf16.mxu0 0
  %201 = vmatpush1.bf16.msra.mxu0 0
  %202 = vmatprep.subr.bf16.mxu0 0
  %203 = vmatpush1.bf16.msra.mxu0 0
  %204 = vmatprep.subr.bf16.mxu0 0
  %205 = vmatpush1.bf16.msra.mxu0 0
  %206 = vmatprep.subr.bf16.mxu0 0
  %207 = vmatpush1.bf16.msra.mxu0 0
  %208 = vmatprep.subr.bf16.mxu0 0
  %209 = vmatpush1.bf16.msra.mxu0 0
  %210 = vmatprep.mubr.bf16.mxu0 0
  %211 = vmatmul.mubr.bf16.gmra.mrb[0].mxu0 %v106
  %v212 = vpop.f32.mrb[0].mxu0
  %v213 = vadd.f32 %v128, %v212
  %v214 = vpop.f32.mrb[0].mxu0
  %v215 = vpop.f32.mrb[0].mxu0
  %v216 = vadd.f32 %v128, %v215
  %v217 = vpop.f32.mrb[0].mxu0
  %218 = vdwg.mxu0
  %v219 = vmax.f32 %v213, 0.0
  %v220 = vmax.f32 %v216, 0.0
  %v221 = vpack.c.bf16 %v220, %v219
  %v222 = vld [vmem:[%s5] sm:$0x1]
  %v223 = vld [vmem:[#allocation2] sm:$0x1]
  %225 = vset.pattern.permute.xlu0 0
  %226 = vperm.xlu0 %225, %v223
  %v227 = vpop.permute.xlu0 %226
  %v229 = vlaneseq
  %v230 = vshrl.u32 %v229, 7
  %v231 = vsub.s32 0, %v230
  %v232 = vrot.slane %v227, %v231
  %233 = vmatprep.subr.bf16.mxu0 0
  %234 = vmatpush1.bf16.xpose.msra.mxu0 %v221
  %235 = vmatprep.subr.bf16.mxu0 0
  %236 = vmatpush1.bf16.xpose.msra.mxu0 0
  %237 = vmatprep.subr.bf16.mxu0 0
  %238 = vmatpush1.bf16.xpose.msra.mxu0 0
  %239 = vmatprep.subr.bf16.mxu0 0
  %240 = vmatpush1.bf16.xpose.msra.mxu0 0
  %241 = vmatprep.subr.bf16.mxu0 0
  %242 = vmatpush1.bf16.xpose.msra.mxu0 0
  %243 = vmatprep.subr.bf16.mxu0 0
  %244 = vmatpush1.bf16.xpose.msra.mxu0 0
  %245 = vmatprep.subr.bf16.mxu0 0
  %246 = vmatpush1.bf16.xpose.msra.mxu0 0
  %247 = vmatprep.subr.bf16.mxu0 0
  %248 = vmatpush1.bf16.xpose.msra.mxu0 0
  %249 = vmatprep.subr.bf16.mxu0 0
  %250 = vmatpush1.bf16.xpose.msra.mxu0 0
  %251 = vmatprep.subr.bf16.mxu0 0
  %252 = vmatpush1.bf16.xpose.msra.mxu0 0
  %253 = vmatprep.subr.bf16.mxu0 0
  %254 = vmatpush1.bf16.xpose.msra.mxu0 0
  %255 = vmatprep.subr.bf16.mxu0 0
  %256 = vmatpush1.bf16.xpose.msra.mxu0 0
  %257 = vmatprep.subr.bf16.mxu0 0
  %258 = vmatpush1.bf16.xpose.msra.mxu0 0
  %259 = vmatprep.subr.bf16.mxu0 0
  %260 = vmatpush1.bf16.xpose.msra.mxu0 0
  %261 = vmatprep.subr.bf16.mxu0 0
  %262 = vmatpush1.bf16.xpose.msra.mxu0 0
  %263 = vmatprep.subr.bf16.mxu0 0
  %264 = vmatpush1.bf16.xpose.msra.mxu0 0
  %265 = vmatprep.mubr.bf16.mxu0 0
  %266 = vmatmul.mubr.bf16.gmra.mrb[0].mxu0 %v222
  %v267 = vpop.f32.mrb[0].mxu0
  %v268 = vadd.f32 %v232, %v267
  %v269 = vpop.f32.mrb[0].mxu0
  %v270 = vpop.f32.mrb[0].mxu0
  %v271 = vpop.f32.mrb[0].mxu0
  %272 = vdwg.mxu0
  %vm273 = vcmask 122880
  %274 = vst.msk [vmem:[%s7] sm:$0x1] %vm273, %v268
  // Predicated region
  $region30: #{mine_forward.1} parent=0 // pred_check
    _
  $region31: #{mine_forward.1} parent=0 // pred_check_branch
    %276 = sbr.rel (0) target = $region33
  $region32: #{mine_forward.1} parent=0 // pred_region
    _
  $region33: #{mine_forward.1} parent=0 // pred_fallthru
    _
  // Predicated region
  $region34: #{mine_forward.1} parent=0 // pred_check
    _
  $region35: #{mine_forward.1} parent=0 // pred_check_branch
    %278 = sbr.rel (0) target = $region37
  $region36: #{mine_forward.1} parent=0 // pred_region
    _
  $region37: #{mine_forward.1} parent=0 // pred_fallthru
    _

</llo_original>
